<compile_context>
chip_gen: v5e
topology: v5e:2x2
jax: 0.10.0
libtpu: 0.0.40
codegen_flags: <defaults>
</compile_context>

<pallas_src>
import functools

import jax
import jax.numpy as jnp
from jax.experimental import pallas as pl
from jax.experimental.pallas import tpu as pltpu


_LANE = 128          # pad hidden / class dims to lane-dense multiples of 128
_K_PAD = 32          # pad x's (small) feature dim only to a multiple of 32
_NEG_BIG = -1e9      # finite "-inf" for padded class columns (0 * -1e9 stays finite)


def _round_up(v, m):
    return ((v + m - 1) // m) * m


def _pad2(a, rows, cols, value=0.0):
    r, c = a.shape
    return jnp.pad(a, ((0, rows - r), (0, cols - c)), constant_values=value)


def _club_categorical_kernel(x_ref, lbl_ref, counts_ref, w1_ref, b1_ref, w2_ref,
                             b2_ref, out_ref, sum_pos_acc, colsum_acc,
                             *, n_valid, tile_n, y_pad, tiles_per_core):
    c = pl.program_id(0)          # core / parallel axis
    j = pl.program_id(1)          # tile within this core (reduction axis)

    @pl.when(j == 0)
    def _init():
        sum_pos_acc[...] = jnp.zeros_like(sum_pos_acc)
        colsum_acc[...] = jnp.zeros_like(colsum_acc)

    x = x_ref[...]                # [TN, XP]  bf16 (or f32) tile of x_samples
    labels = lbl_ref[...]         # [TN, 1]   int32 class labels (-1 on padded rows)

    # --- varnet: Linear -> ReLU -> Linear (MXU matmuls, f32 accumulation) ---
    h = jnp.dot(x, w1_ref[...], preferred_element_type=jnp.float32) + b1_ref[...]
    h = jnp.maximum(h, 0.0)                                              # [TN, HP]
    logits = jnp.dot(h.astype(x.dtype), w2_ref[...],
                     preferred_element_type=jnp.float32) + b2_ref[...]   # [TN, YP]

    # --- log_softmax over classes, in f32.  Padded class columns carry a
    # -1e9 bias so exp() underflows to exactly 0 and they don't perturb lse. ---
    m = jnp.max(logits, axis=-1, keepdims=True)
    shifted = logits - m
    lse = jnp.log(jnp.sum(jnp.exp(shifted), axis=-1, keepdims=True))
    lsm = shifted - lse                                                  # [TN, YP]

    # positive[i] = lsm[i, labels[i]]  (padded rows have label -1 -> contribute 0)
    sel = jax.lax.broadcasted_iota(jnp.int32, (tile_n, y_pad), 1) == labels
    positive = jnp.sum(jnp.where(sel, lsm, 0.0), axis=-1, keepdims=True)  # [TN, 1]
    sum_pos_acc[...] += jnp.sum(positive)

    # Column-sum of lsm; only tiles that contain padded rows pay for the mask.
    global_tile = c * tiles_per_core + j
    has_pad = (global_tile + 1) * tile_n > n_valid

    @pl.when(jnp.logical_not(has_pad))
    def _full_tile():
        colsum_acc[...] += jnp.sum(lsm, axis=0, keepdims=True)

    @pl.when(has_pad)
    def _padded_tile():
        row = (jax.lax.broadcasted_iota(jnp.int32, (tile_n, 1), 0)
               + global_tile * tile_n)
        valid = (row < n_valid).astype(jnp.float32)
        colsum_acc[...] += jnp.sum(lsm * valid, axis=0, keepdims=True)

    @pl.when(j == pl.num_programs(1) - 1)
    def _finalize():
        inv_n = jnp.float32(1.0 / n_valid)
        # sum_i negative[i] (this core's rows) = (partial colsum) . counts / N
        neg = jnp.sum(colsum_acc[...] * counts_ref[...]) * inv_n
        val = (sum_pos_acc[...] - neg) * inv_n                           # (1, 1)
        out_ref[...] = jnp.broadcast_to(val[None], out_ref.shape)


def club_categorical_forward(x_samples, y_samples, w1, b1, w2, b2,
                             *, tile_n=1024, use_bf16=True, split_cores=True):
    """CLUBCategorical.forward.

    Weight layout: w1 [x_dim, hidden], w2 [hidden, y_dim] (transpose of
    nn.Linear's [out, in]); biases 1-D or [1, out].  Returns shape (1,) f32.
    """
    n, x_dim = x_samples.shape
    n_y, y_dim = y_samples.shape
    assert n == n_y
    hidden = w1.shape[1]
    assert w1.shape[0] == x_dim and w2.shape == (hidden, y_dim)

    # ---- wrapper-side preprocessing (plain XLA, negligible cost) ----
    labels = jnp.argmax(y_samples, axis=-1).astype(jnp.int32)            # [N]
    counts = jnp.bincount(labels, length=y_dim).astype(jnp.float32)      # [y_dim]

    xp = _round_up(x_dim, _K_PAD)     # small pad only (HBM-streamed per row)
    hp = _round_up(hidden, _LANE)     # resident weights / VMEM-only intermediates
    yp = _round_up(y_dim, _LANE)

    tn = _round_up(min(tile_n, _round_up(n, 16)), 16)
    tiles = -(-n // tn)
    num_cores = 2 if (split_cores and tiles >= 2) else 1
    tiles = _round_up(tiles, num_cores)
    tiles_per_core = tiles // num_cores
    n_pad = tiles * tn

    mm_dtype = jnp.bfloat16 if use_bf16 else jnp.float32

    x_p = _pad2(x_samples.astype(jnp.float32), n_pad, xp).astype(mm_dtype)
    lbl_p = jnp.pad(labels, (0, n_pad - n), constant_values=-1).reshape(n_pad, 1)
    counts_p = jnp.pad(counts, (0, yp - y_dim)).reshape(1, yp)  # padded classes -> 0

    w1_p = _pad2(w1.astype(jnp.float32), xp, hp).astype(mm_dtype)
    b1_p = _pad2(b1.reshape(1, -1).astype(jnp.float32), 1, hp)
    w2_p = _pad2(w2.astype(jnp.float32), hp, yp).astype(mm_dtype)
    # Padded class columns get a large negative bias so the softmax ignores them.
    b2_p = jnp.pad(b2.reshape(1, -1).astype(jnp.float32),
                   ((0, 0), (0, yp - y_dim)), constant_values=_NEG_BIG)

    kernel = functools.partial(_club_categorical_kernel, n_valid=n, tile_n=tn,
                               y_pad=yp, tiles_per_core=tiles_per_core)

    out = pl.pallas_call(
        kernel,
        out_shape=jax.ShapeDtypeStruct((num_cores, 8, 128), jnp.float32),
        grid=(num_cores, tiles_per_core),
        in_specs=[
            # x / labels tiles: streamed + pipelined over N
            pl.BlockSpec((tn, xp), lambda c, j: (c * tiles_per_core + j, 0)),
            pl.BlockSpec((tn, 1), lambda c, j: (c * tiles_per_core + j, 0)),
            # tiny resident tensors (DMA'd once, constant index maps)
            pl.BlockSpec((1, yp), lambda c, j: (0, 0)),    # class counts
            pl.BlockSpec((xp, hp), lambda c, j: (0, 0)),   # W1
            pl.BlockSpec((1, hp), lambda c, j: (0, 0)),    # b1
            pl.BlockSpec((hp, yp), lambda c, j: (0, 0)),   # W2
            pl.BlockSpec((1, yp), lambda c, j: (0, 0)),    # b2
        ],
        # One output block per core; written only at that core's last tile.
        out_specs=pl.BlockSpec((1, 8, 128), lambda c, j: (c, 0, 0)),
        scratch_shapes=[
            pltpu.VMEM((1, 1), jnp.float32),    # per-core sum of positive terms
            pltpu.VMEM((1, yp), jnp.float32),   # per-core sum_i lsm[i, :]
        ],
        compiler_params=pltpu.CompilerParams(
            dimension_semantics=("parallel", "arbitrary")),
    )(x_p, lbl_p, counts_p, w1_p, b1_p, w2_p, b2_p)

    # Sum the per-core partials (linear reduction), keep PyTorch's shape (1,).
    return jnp.sum(out[:, 0, 0]).reshape(1)


def _reference_f32(x, y, w1, b1, w2, b2):
    h = jnp.maximum(x @ w1 + b1.reshape(1, -1), 0.0)
    logits = h @ w2 + b2.reshape(1, -1)
    lsm = jax.nn.log_softmax(logits, axis=-1)
    cls = jnp.argmax(y, axis=-1)
    log_mat = lsm[:, cls]                     # log_mat[i, j] = lsm[i, cls[j]]
    positive = jnp.diag(log_mat)
    negative = jnp.mean(log_mat, axis=1)
    return jnp.mean(positive - negative, keepdims=True)


if __name__ == "__main__":
    N, X_DIM, Y_DIM, HIDDEN = 200, 20, 10, 48
    TILE_N = 64   # padded N = 256 -> 4 tiles, 2 per core: exercises grid + padding

    key = jax.random.PRNGKey(0)
    kx, ky, kw1, kb1, kw2, kb2 = jax.random.split(key, 6)

    x_samples = jax.random.normal(kx, (N, X_DIM), dtype=jnp.float32)
    labels = jax.random.randint(ky, (N,), 0, Y_DIM)
    y_samples = jax.nn.one_hot(labels, Y_DIM, dtype=jnp.float32)

    # Deterministic synthetic parameters (nn.Linear weights stored as [in, out]).
    w1 = jax.random.normal(kw1, (X_DIM, HIDDEN), dtype=jnp.float32) * 0.1
    b1 = jax.random.normal(kb1, (HIDDEN,), dtype=jnp.float32) * 0.1
    w2 = jax.random.normal(kw2, (HIDDEN, Y_DIM), dtype=jnp.float32) * 0.1
    b2 = jax.random.normal(kb2, (Y_DIM,), dtype=jnp.float32) * 0.1

    ref = _reference_f32(x_samples, y_samples, w1, b1, w2, b2)

    # f32-operand kernel, multi-tile + 2-way core split: checks the tiling /
    # padding / masking / accumulation logic (tolerance covers TPU default
    # matmul precision differences between XLA and Mosaic).
    out_f32 = club_categorical_forward(x_samples, y_samples, w1, b1, w2, b2,
                                       tile_n=TILE_N, use_bf16=False)
    out_f32 = jax.block_until_ready(out_f32)
    assert out_f32.shape == (1,), out_f32.shape
    assert jnp.allclose(out_f32, ref, atol=1e-3, rtol=1e-3), (out_f32, ref)

    # Single-tile / single-core path (default large tile_n).
    out_one = club_categorical_forward(x_samples, y_samples, w1, b1, w2, b2,
                                       use_bf16=False)
    out_one = jax.block_until_ready(out_one)
    assert jnp.allclose(out_one, ref, atol=1e-3, rtol=1e-3), (out_one, ref)

    # bf16-operand kernel (MXU fast path, recommended perf config): looser
    # tolerance for the bf16 rounding of x / W1 / W2 / h.
    out_bf16 = club_categorical_forward(x_samples, y_samples, w1, b1, w2, b2,
                                        tile_n=TILE_N, use_bf16=True)
    out_bf16 = jax.block_until_ready(out_bf16)
    assert out_bf16.shape == (1,), out_bf16.shape
    assert jnp.allclose(out_bf16, ref, atol=5e-2, rtol=5e-2), (out_bf16, ref)

    print("KERNEL_OK")
</pallas_src>

<mosaic_0001>
module attributes {stable_mosaic.version = 11 : i64} {
  func.func @_club_categorical_kernel(%arg0: i32, %arg1: i32, %arg2: memref<64x32xf32, #tpu.memory_space<vmem>>, %arg3: memref<64x1xi32, #tpu.memory_space<vmem>>, %arg4: memref<1x128xf32, #tpu.memory_space<vmem>>, %arg5: memref<32x128xf32, #tpu.memory_space<vmem>>, %arg6: memref<1x128xf32, #tpu.memory_space<vmem>>, %arg7: memref<128x128xf32, #tpu.memory_space<vmem>>, %arg8: memref<1x128xf32, #tpu.memory_space<vmem>>, %arg9: memref<1x8x128xf32, #tpu.memory_space<vmem>>, %arg10: memref<1x1xf32, #tpu.memory_space<vmem>>, %arg11: memref<1x128xf32, #tpu.memory_space<vmem>>) attributes {dimension_semantics = [#tpu.dimension_semantics<parallel>, #tpu.dimension_semantics<arbitrary>], iteration_bounds = array<i64: 2, 2>, scalar_prefetch = 0 : i64, scratch_operands = 2 : i64, tpu.core_type = #tpu.core_type<tc>, window_params = [{transform_indices = @transform_0, window_bounds = array<i64: 64, 32>}, {transform_indices = @transform_1, window_bounds = array<i64: 64, 1>}, {pipeline_mode = #tpu.pipeline_mode<synchronous>, transform_indices = @transform_2, window_bounds = array<i64: 1, 128>}, {pipeline_mode = #tpu.pipeline_mode<synchronous>, transform_indices = @transform_3, window_bounds = array<i64: 32, 128>}, {pipeline_mode = #tpu.pipeline_mode<synchronous>, transform_indices = @transform_4, window_bounds = array<i64: 1, 128>}, {pipeline_mode = #tpu.pipeline_mode<synchronous>, transform_indices = @transform_5, window_bounds = array<i64: 128, 128>}, {pipeline_mode = #tpu.pipeline_mode<synchronous>, transform_indices = @transform_6, window_bounds = array<i64: 1, 128>}, {transform_indices = @transform_7, window_bounds = array<i64: 1, 8, 128>}]} {
    %c0_i32 = arith.constant 0 : i32
    %0 = arith.cmpi eq, %arg1, %c0_i32 : i32
    %1 = arith.extui %0 : i1 to i32
    %c0_i32_0 = arith.constant 0 : i32
    %2 = arith.cmpi ne, %1, %c0_i32_0 : i32
    scf.if %2 {
      %cst_27 = arith.constant 0.000000e+00 : f32
      %55 = vector.broadcast %cst_27 : f32 to vector<1x1xf32>
      %c0_28 = arith.constant 0 : index
      %c0_29 = arith.constant 0 : index
      %56 = vector.load %arg10[%c0_28, %c0_29] : memref<1x1xf32, #tpu.memory_space<vmem>>, vector<1x1xf32>
      tpu.vector_store %arg10[%c0_28, %c0_29], %55 {strides = array<i32>} : memref<1x1xf32, #tpu.memory_space<vmem>>, vector<1x1xf32>,
      %cst_30 = arith.constant 0.000000e+00 : f32
      %57 = vector.broadcast %cst_30 : f32 to vector<1x128xf32>
      %c0_31 = arith.constant 0 : index
      %c0_32 = arith.constant 0 : index
      %58 = vector.load %arg11[%c0_31, %c0_32] : memref<1x128xf32, #tpu.memory_space<vmem>>, vector<1x128xf32>
      tpu.vector_store %arg11[%c0_31, %c0_32], %57 {strides = array<i32>} : memref<1x128xf32, #tpu.memory_space<vmem>>, vector<1x128xf32>,
    } else {
    }
    %c0 = arith.constant 0 : index
    %c0_1 = arith.constant 0 : index
    %3 = vector.load %arg2[%c0, %c0_1] : memref<64x32xf32, #tpu.memory_space<vmem>>, vector<64x32xf32>
    %c0_2 = arith.constant 0 : index
    %c0_3 = arith.constant 0 : index
    %4 = vector.load %arg3[%c0_2, %c0_3] : memref<64x1xi32, #tpu.memory_space<vmem>>, vector<64x1xi32>
    %c0_4 = arith.constant 0 : index
    %c0_5 = arith.constant 0 : index
    %5 = vector.load %arg5[%c0_4, %c0_5] : memref<32x128xf32, #tpu.memory_space<vmem>>, vector<32x128xf32>
    %cst = arith.constant dense<0.000000e+00> : vector<64x128xf32>
    %6 = tpu.matmul %3, %5, %cst {dimension_numbers = #tpu.dot_dimension_numbers<[1], [0], [0], [1], [0, 0, 1, 1], [], []>} : vector<64x32xf32>, vector<32x128xf32>, vector<64x128xf32> -> vector<64x128xf32>
    %c0_6 = arith.constant 0 : index
    %c0_7 = arith.constant 0 : index
    %7 = vector.load %arg6[%c0_6, %c0_7] : memref<1x128xf32, #tpu.memory_space<vmem>>, vector<1x128xf32>
    %8 = vector.broadcast %7 : vector<1x128xf32> to vector<64x128xf32>
    %9 = arith.addf %6, %8 : vector<64x128xf32>
    %cst_8 = arith.constant 0.000000e+00 : f32
    %10 = vector.broadcast %cst_8 : f32 to vector<64x128xf32>
    %11 = arith.maximumf %9, %10 : vector<64x128xf32>
    %c0_9 = arith.constant 0 : index
    %c0_10 = arith.constant 0 : index
    %12 = vector.load %arg7[%c0_9, %c0_10] : memref<128x128xf32, #tpu.memory_space<vmem>>, vector<128x128xf32>
    %cst_11 = arith.constant dense<0.000000e+00> : vector<64x128xf32>
    %13 = tpu.matmul %11, %12, %cst_11 {dimension_numbers = #tpu.dot_dimension_numbers<[1], [0], [0], [1], [0, 0, 1, 1], [], []>} : vector<64x128xf32>, vector<128x128xf32>, vector<64x128xf32> -> vector<64x128xf32>
    %c0_12 = arith.constant 0 : index
    %c0_13 = arith.constant 0 : index
    %14 = vector.load %arg8[%c0_12, %c0_13] : memref<1x128xf32, #tpu.memory_space<vmem>>, vector<1x128xf32>
    %15 = vector.broadcast %14 : vector<1x128xf32> to vector<64x128xf32>
    %16 = arith.addf %13, %15 : vector<64x128xf32>
    %cst_14 = arith.constant dense<0xFF800000> : vector<64xf32>
    %17 = vector.multi_reduction <maximumf>, %16, %cst_14 [1] : vector<64x128xf32> to vector<64xf32>
    %18 = vector.shape_cast %17 : vector<64xf32> to vector<64x1xf32>
    %19 = vector.broadcast %18 : vector<64x1xf32> to vector<64x128xf32>
    %20 = arith.subf %16, %19 : vector<64x128xf32>
    %21 = math.exp %20 : vector<64x128xf32>
    %cst_15 = arith.constant dense<0.000000e+00> : vector<64xf32>
    %22 = vector.multi_reduction <add>, %21, %cst_15 [1] : vector<64x128xf32> to vector<64xf32>
    %23 = vector.shape_cast %22 : vector<64xf32> to vector<64x1xf32>
    %24 = math.log %23 : vector<64x1xf32>
    %25 = vector.broadcast %24 : vector<64x1xf32> to vector<64x128xf32>
    %26 = arith.subf %20, %25 : vector<64x128xf32>
    %27 = tpu.iota {dimensions = array<i32: 1>} : vector<64x128xi32>
    %28 = vector.broadcast %4 : vector<64x1xi32> to vector<64x128xi32>
    %29 = arith.cmpi eq, %27, %28 : vector<64x128xi32>
    %cst_16 = arith.constant 0.000000e+00 : f32
    %30 = vector.broadcast %cst_16 : f32 to vector<64x128xf32>
    %31 = arith.select %29, %26, %30 : vector<64x128xi1>, vector<64x128xf32>
    %cst_17 = arith.constant dense<0.000000e+00> : vector<64xf32>
    %32 = vector.multi_reduction <add>, %31, %cst_17 [1] : vector<64x128xf32> to vector<64xf32>
    %33 = vector.shape_cast %32 : vector<64xf32> to vector<64x1xf32>
    %c0_18 = arith.constant 0 : index
    %c0_19 = arith.constant 0 : index
    %34 = vector.load %arg10[%c0_18, %c0_19] : memref<1x1xf32, #tpu.memory_space<vmem>>, vector<1x1xf32>
    %35 = vector.shape_cast %33 : vector<64x1xf32> to vector<1x64x1xf32>
    %cst_20 = arith.constant dense<0.000000e+00> : vector<1xf32>
    %36 = vector.multi_reduction <add>, %35, %cst_20 [1, 2] : vector<1x64x1xf32> to vector<1xf32>
    %37 = vector.shape_cast %36 : vector<1xf32> to vector<1x1x1xf32>
    %38 = vector.extract %37[0, 0, 0] : f32 from vector<1x1x1xf32>
    %39 = vector.broadcast %38 : f32 to vector<1x1xf32>
    %40 = arith.addf %34, %39 : vector<1x1xf32>
    %c0_21 = arith.constant 0 : index
    %c0_22 = arith.constant 0 : index
    %41 = vector.load %arg10[%c0_21, %c0_22] : memref<1x1xf32, #tpu.memory_space<vmem>>, vector<1x1xf32>
    tpu.vector_store %arg10[%c0_21, %c0_22], %40 {strides = array<i32>} : memref<1x1xf32, #tpu.memory_space<vmem>>, vector<1x1xf32>,
    %c2_i32 = arith.constant 2 : i32
    %42 = arith.muli %arg0, %c2_i32 : i32
    %43 = arith.addi %42, %arg1 : i32
    %c1_i32 = arith.constant 1 : i32
    %44 = arith.addi %43, %c1_i32 : i32
    %c64_i32 = arith.constant 64 : i32
    %45 = arith.muli %44, %c64_i32 : i32
    %c200_i32 = arith.constant 200 : i32
    %46 = arith.cmpi sgt, %45, %c200_i32 : i32
    %true = arith.constant true
    %47 = arith.xori %46, %true : i1
    %48 = arith.extui %47 : i1 to i32
    %c0_i32_23 = arith.constant 0 : i32
    %49 = arith.cmpi ne, %48, %c0_i32_23 : i32
    scf.if %49 {
      %c0_27 = arith.constant 0 : index
      %c0_28 = arith.constant 0 : index
      %55 = vector.load %arg11[%c0_27, %c0_28] : memref<1x128xf32, #tpu.memory_space<vmem>>, vector<1x128xf32>
      %cst_29 = arith.constant dense<0.000000e+00> : vector<128xf32>
      %56 = vector.multi_reduction <add>, %26, %cst_29 [0] : vector<64x128xf32> to vector<128xf32>
      %57 = vector.shape_cast %56 : vector<128xf32> to vector<1x128xf32>
      %58 = arith.addf %55, %57 : vector<1x128xf32>
      %c0_30 = arith.constant 0 : index
      %c0_31 = arith.constant 0 : index
      %59 = vector.load %arg11[%c0_30, %c0_31] : memref<1x128xf32, #tpu.memory_space<vmem>>, vector<1x128xf32>
      tpu.vector_store %arg11[%c0_30, %c0_31], %58 {strides = array<i32>} : memref<1x128xf32, #tpu.memory_space<vmem>>, vector<1x128xf32>,
    } else {
    }
    %50 = arith.extui %46 : i1 to i32
    %c0_i32_24 = arith.constant 0 : i32
    %51 = arith.cmpi ne, %50, %c0_i32_24 : i32
    scf.if %51 {
      %55 = tpu.iota {dimensions = array<i32: 0>} : vector<64x1xi32>
      %c64_i32_27 = arith.constant 64 : i32
      %56 = arith.muli %43, %c64_i32_27 : i32
      %57 = vector.broadcast %56 : i32 to vector<64x1xi32>
      %58 = arith.addi %55, %57 : vector<64x1xi32>
      %c200_i32_28 = arith.constant 200 : i32
      %59 = vector.broadcast %c200_i32_28 : i32 to vector<64x1xi32>
      %60 = arith.cmpi slt, %58, %59 : vector<64x1xi32>
      %61 = arith.extui %60 : vector<64x1xi1> to vector<64x1xi32>
      %62 = arith.sitofp %61 : vector<64x1xi32> to vector<64x1xf32>
      %c0_29 = arith.constant 0 : index
      %c0_30 = arith.constant 0 : index
      %63 = vector.load %arg11[%c0_29, %c0_30] : memref<1x128xf32, #tpu.memory_space<vmem>>, vector<1x128xf32>
      %64 = vector.broadcast %62 : vector<64x1xf32> to vector<64x128xf32>
      %65 = arith.mulf %26, %64 : vector<64x128xf32>
      %cst_31 = arith.constant dense<0.000000e+00> : vector<128xf32>
      %66 = vector.multi_reduction <add>, %65, %cst_31 [0] : vector<64x128xf32> to vector<128xf32>
      %67 = vector.shape_cast %66 : vector<128xf32> to vector<1x128xf32>
      %68 = arith.addf %63, %67 : vector<1x128xf32>
      %c0_32 = arith.constant 0 : index
      %c0_33 = arith.constant 0 : index
      %69 = vector.load %arg11[%c0_32, %c0_33] : memref<1x128xf32, #tpu.memory_space<vmem>>, vector<1x128xf32>
      tpu.vector_store %arg11[%c0_32, %c0_33], %68 {strides = array<i32>} : memref<1x128xf32, #tpu.memory_space<vmem>>, vector<1x128xf32>,
    } else {
    }
    %c1_i32_25 = arith.constant 1 : i32
    %52 = arith.cmpi eq, %arg1, %c1_i32_25 : i32
    %53 = arith.extui %52 : i1 to i32
    %c0_i32_26 = arith.constant 0 : i32
    %54 = arith.cmpi ne, %53, %c0_i32_26 : i32
    scf.if %54 {
      %c0_27 = arith.constant 0 : index
      %c0_28 = arith.constant 0 : index
      %55 = vector.load %arg11[%c0_27, %c0_28] : memref<1x128xf32, #tpu.memory_space<vmem>>, vector<1x128xf32>
      %c0_29 = arith.constant 0 : index
      %c0_30 = arith.constant 0 : index
      %56 = vector.load %arg4[%c0_29, %c0_30] : memref<1x128xf32, #tpu.memory_space<vmem>>, vector<1x128xf32>
      %57 = arith.mulf %55, %56 : vector<1x128xf32>
      %58 = vector.shape_cast %57 : vector<1x128xf32> to vector<1x1x128xf32>
      %cst_31 = arith.constant dense<0.000000e+00> : vector<1xf32>
      %59 = vector.multi_reduction <add>, %58, %cst_31 [1, 2] : vector<1x1x128xf32> to vector<1xf32>
      %60 = vector.shape_cast %59 : vector<1xf32> to vector<1x1x1xf32>
      %61 = vector.extract %60[0, 0, 0] : f32 from vector<1x1x1xf32>
      %cst_32 = arith.constant 5.000000e-03 : f32
      %62 = arith.mulf %61, %cst_32 : f32
      %c0_33 = arith.constant 0 : index
      %c0_34 = arith.constant 0 : index
      %63 = vector.load %arg10[%c0_33, %c0_34] : memref<1x1xf32, #tpu.memory_space<vmem>>, vector<1x1xf32>
      %64 = vector.broadcast %62 : f32 to vector<1x1xf32>
      %65 = arith.subf %63, %64 : vector<1x1xf32>
      %cst_35 = arith.constant 5.000000e-03 : f32
      %66 = vector.broadcast %cst_35 : f32 to vector<1x1xf32>
      %67 = arith.mulf %65, %66 : vector<1x1xf32>
      %68 = vector.shape_cast %67 : vector<1x1xf32> to vector<1x1x1xf32>
      %69 = vector.shape_cast %68 : vector<1x1x1xf32> to vector<1x1x1xf32>
      %70 = vector.broadcast %69 : vector<1x1x1xf32> to vector<1x8x128xf32>
      %c0_36 = arith.constant 0 : index
      %c0_37 = arith.constant 0 : index
      %c0_38 = arith.constant 0 : index
      %71 = vector.load %arg9[%c0_36, %c0_37, %c0_38] : memref<1x8x128xf32, #tpu.memory_space<vmem>>, vector<1x8x128xf32>
      tpu.vector_store %arg9[%c0_36, %c0_37, %c0_38], %70 {strides = array<i32>} : memref<1x8x128xf32, #tpu.memory_space<vmem>>, vector<1x8x128xf32>,
    } else {
    }
    return
  }
  func.func @transform_0(%arg0: i32, %arg1: i32) -> (i32, i32) {
    %c2_i32 = arith.constant 2 : i32
    %0 = arith.muli %arg0, %c2_i32 : i32
    %1 = arith.addi %0, %arg1 : i32
    %c0_i32 = arith.constant 0 : i32
    %c0_i32_0 = arith.constant 0 : i32
    return %1, %c0_i32 : i32, i32
  }
  func.func @transform_1(%arg0: i32, %arg1: i32) -> (i32, i32) {
    %c2_i32 = arith.constant 2 : i32
    %0 = arith.muli %arg0, %c2_i32 : i32
    %1 = arith.addi %0, %arg1 : i32
    %c0_i32 = arith.constant 0 : i32
    %c0_i32_0 = arith.constant 0 : i32
    return %1, %c0_i32 : i32, i32
  }
  func.func @transform_2(%arg0: i32, %arg1: i32) -> (i32, i32) {
    %c0_i32 = arith.constant 0 : i32
    %c0_i32_0 = arith.constant 0 : i32
    %c0_i32_1 = arith.constant 0 : i32
    return %c0_i32, %c0_i32_0 : i32, i32
  }
  func.func @transform_3(%arg0: i32, %arg1: i32) -> (i32, i32) {
    %c0_i32 = arith.constant 0 : i32
    %c0_i32_0 = arith.constant 0 : i32
    %c0_i32_1 = arith.constant 0 : i32
    return %c0_i32, %c0_i32_0 : i32, i32
  }
  func.func @transform_4(%arg0: i32, %arg1: i32) -> (i32, i32) {
    %c0_i32 = arith.constant 0 : i32
    %c0_i32_0 = arith.constant 0 : i32
    %c0_i32_1 = arith.constant 0 : i32
    return %c0_i32, %c0_i32_0 : i32, i32
  }
  func.func @transform_5(%arg0: i32, %arg1: i32) -> (i32, i32) {
    %c0_i32 = arith.constant 0 : i32
    %c0_i32_0 = arith.constant 0 : i32
    %c0_i32_1 = arith.constant 0 : i32
    return %c0_i32, %c0_i32_0 : i32, i32
  }
  func.func @transform_6(%arg0: i32, %arg1: i32) -> (i32, i32) {
    %c0_i32 = arith.constant 0 : i32
    %c0_i32_0 = arith.constant 0 : i32
    %c0_i32_1 = arith.constant 0 : i32
    return %c0_i32, %c0_i32_0 : i32, i32
  }
  func.func @transform_7(%arg0: i32, %arg1: i32) -> (i32, i32, i32) {
    %c0_i32 = arith.constant 0 : i32
    %c0_i32_0 = arith.constant 0 : i32
    %c0_i32_1 = arith.constant 0 : i32
    return %arg0, %c0_i32, %c0_i32_0 : i32, i32, i32
  }
}

</mosaic_0001>

<llo_original>
// kernel: tpu_custom_call.1
$region0: #{tpu_custom_call.1}
  #allocation0 [shape = 'u32[]', space=smem, size = 0x4, offset = 0x4, fixed_abs, tag = 'smem constant byte address 0x4 - core index']
  #allocation1 [shape = 'u32[72,128]{1,0:T(1,128)}', space=vmem, size = 0x9000, scoped, tag = 'internal scratch']
  #allocation2 [shape = 'f32[1,1]{1,0:T(1,128)}', space=vmem, size = 0x200, scoped, tag = 'scratch operand']
  #allocation3 [shape = 'f32[1,128]{1,0:T(1,128)}', space=vmem, size = 0x200, scoped, tag = 'scratch operand']
  %s0 = inlined_call_operand.vmem [shape: f32[256,32], index: 0, kind: input, shape index: {}]
  %s1 = inlined_call_operand.vmem [shape: s32[256,1], index: 1, kind: input, shape index: {}]
  %s2 = inlined_call_operand.vmem [shape: f32[1,128], index: 2, kind: input, shape index: {}]
  %s3 = inlined_call_operand.vmem [shape: f32[32,128], index: 3, kind: input, shape index: {}]
  %s4 = inlined_call_operand.vmem [shape: f32[1,128], index: 4, kind: input, shape index: {}]
  %s5 = inlined_call_operand.vmem [shape: f32[128,128], index: 5, kind: input, shape index: {}]
  %s6 = inlined_call_operand.vmem [shape: f32[1,128], index: 6, kind: input, shape index: {}]
  %s7 = inlined_call_operand.hbm [shape: f32[2,8,128], index: 7, kind: output, shape index: {}]
  %s8 = sld [smem:[#allocation0]]
  $region77: #{tpu_custom_call.1} parent=0
    _
  %s10 = ssub.s32 1, %s8
  %s11 = scalar_select 0, %s10, %s8
  $region1: #{tpu_custom_call.1} parent=0
    #allocation4 [shape = 'u8[8192]{0}', space=vmem, size = 0x2000, scoped, tag = 'output window, operand 0']
    #allocation5 [shape = 's32[2]{0}', space=sflag, size = 0x8, scoped, tag = 'scoped memory for tpu_custom_call.1']
    %12 = vsyncpa [#allocation5], 0
    %s13 = scalar_lea.sflag [#allocation5], 1
    %14 = vsyncpa %s13, 0
    loop: start=0, step=1, limit=6
    $region2: #{tpu_custom_call.1} parent=1 // loop_pre_header
      _
    $region3: #{tpu_custom_call.1} parent=1 // loop_header
      %s16 = sphi 0, %s20
      %p17 = scmp.ge.s32.totalorder %s16, 6
      %s23 = sphi 0, %s35
      %s24 = sphi 0, %s31
      %s25 = sphi 0, %s23
      %s26 = sphi 0, %s24
      %s27 = sphi 0, %s25
      %s28 = sphi 0, %s26
      %s42 = sphi 0, %s44
      %s45 = sphi 0, %s42
      %s46 = sphi 0, %s45
      %s62 = sphi 0, %s46
      %s72 = sphi 0, %s74
      %s75 = sphi 0, %s72
      %s76 = sphi 0, %s75
      %s92 = sphi 0, %s76
      %s96 = sphi 0, %s96
      %s98 = sphi 0, %s96
      %s99 = sphi 0, %s98
      %s113 = sphi 0, %s99
      %s117 = sphi 0, %s117
      %s119 = sphi 0, %s117
      %s120 = sphi 0, %s119
      %s134 = sphi 0, %s120
      %s138 = sphi 0, %s138
      %s140 = sphi 0, %s138
      %s141 = sphi 0, %s140
      %s155 = sphi 0, %s141
      %s159 = sphi 0, %s159
      %s161 = sphi 0, %s159
      %s162 = sphi 0, %s161
      %s176 = sphi 0, %s162
      %s180 = sphi 0, %s180
      %s182 = sphi 0, %s180
      %s183 = sphi 0, %s182
      %s197 = sphi 0, %s183
      %s203 = sphi 0, %s205
      %s206 = sphi 0, %s203
      %s207 = sphi 0, %s206
      %s223 = sphi 0, %s207
    $region4: #{tpu_custom_call.1} parent=1 // loop_header_branch
      %19 = sbr.rel (%p17) target = $region8
    $region5: #{tpu_custom_call.1} parent=1 // loop_body
      %s21 = ssub.s32 %s16, 1
      %s22 = ssub.s32 %s16, 2
      %s29 = sadd.s32 1, %s24
      %p30 = scmp.ge.s32.totalorder %s29, 2
      %s31 = scalar_select %p30, 0, %s29
      %s32 = sadd.s32 1, %s23
      %s33 = scalar_select %p30, %s32, %s23
      %p34 = scmp.ge.s32.totalorder %s33, 2
      %s35 = scalar_select %p34, 0, %s33
      %s36 = smul.u32 %s23, 2
      %s37 = sadd.s32 %s36, %s24
      %s38 = smul.u32 %s35, 2
      %s39 = sadd.s32 %s38, %s31
      %s40 = ssub.s32 %s37, %s39
      %p41 = scmp.eq.s32.totalorder %s40, 0
      %s43 = sadd.s32 %s42, 1
      %s44 = scalar_select %p41, %s42, %s43
      %p47 = pneg %p41
      %p48 = scmp.eq.s32.totalorder %s16, 3
      %p49 = por %p47, %p48
      %p50 = scmp.ne.s32.totalorder %s42, %s45
      %p51 = scmp.eq.s32.totalorder %s16, 0
      %p52 = por %p50, %p51
      %p53 = scmp.ne.s32.totalorder %s42, %s45
      %p54 = scmp.eq.s32.totalorder %s21, 3
      %p55 = por %p53, %p54
      %p56 = scmp.ne.s32.totalorder %s45, %s46
      %p57 = scmp.eq.s32.totalorder %s21, 0
      %p58 = por %p56, %p57
      %p59 = scmp.ne.s32.totalorder %s45, %s46
      %p60 = scmp.eq.s32.totalorder %s22, 3
      %p61 = por %p59, %p60
      %p63 = scmp.ne.s32.totalorder %s46, %s62
      %p64 = scmp.eq.s32.totalorder %s22, 0
      %p65 = por %p63, %p64
      %s66 = smul.u32 %s23, 2
      %s67 = sadd.s32 %s66, %s24
      %s68 = smul.u32 %s35, 2
      %s69 = sadd.s32 %s68, %s31
      %s70 = ssub.s32 %s67, %s69
      %p71 = scmp.eq.s32.totalorder %s70, 0
      %s73 = sadd.s32 %s72, 1
      %s74 = scalar_select %p71, %s72, %s73
      %p77 = pneg %p71
      %p78 = scmp.eq.s32.totalorder %s16, 3
      %p79 = por %p77, %p78
      %p80 = scmp.ne.s32.totalorder %s72, %s75
      %p81 = scmp.eq.s32.totalorder %s16, 0
      %p82 = por %p80, %p81
      %p83 = scmp.ne.s32.totalorder %s72, %s75
      %p84 = scmp.eq.s32.totalorder %s21, 3
      %p85 = por %p83, %p84
      %p86 = scmp.ne.s32.totalorder %s75, %s76
      %p87 = scmp.eq.s32.totalorder %s21, 0
      %p88 = por %p86, %p87
      %p89 = scmp.ne.s32.totalorder %s75, %s76
      %p90 = scmp.eq.s32.totalorder %s22, 3
      %p91 = por %p89, %p90
      %p93 = scmp.ne.s32.totalorder %s76, %s92
      %p94 = scmp.eq.s32.totalorder %s22, 0
      %p95 = por %p93, %p94
      %s97 = sadd.s32 %s96, 1
      %p100 = scmp.eq.s32.totalorder %s16, 3
      %p101 = scmp.ne.s32.totalorder %s96, %s98
      %p102 = scmp.eq.s32.totalorder %s16, 0
      %p103 = por %p101, %p102
      %p104 = scmp.ne.s32.totalorder %s96, %s98
      %p105 = scmp.eq.s32.totalorder %s21, 3
      %p106 = por %p104, %p105
      %p107 = scmp.ne.s32.totalorder %s98, %s99
      %p108 = scmp.eq.s32.totalorder %s21, 0
      %p109 = por %p107, %p108
      %p110 = scmp.ne.s32.totalorder %s98, %s99
      %p111 = scmp.eq.s32.totalorder %s22, 3
      %p112 = por %p110, %p111
      %p114 = scmp.ne.s32.totalorder %s99, %s113
      %p115 = scmp.eq.s32.totalorder %s22, 0
      %p116 = por %p114, %p115
      %s118 = sadd.s32 %s117, 1
      %p121 = scmp.eq.s32.totalorder %s16, 3
      %p122 = scmp.ne.s32.totalorder %s117, %s119
      %p123 = scmp.eq.s32.totalorder %s16, 0
      %p124 = por %p122, %p123
      %p125 = scmp.ne.s32.totalorder %s117, %s119
      %p126 = scmp.eq.s32.totalorder %s21, 3
      %p127 = por %p125, %p126
      %p128 = scmp.ne.s32.totalorder %s119, %s120
      %p129 = scmp.eq.s32.totalorder %s21, 0
      %p130 = por %p128, %p129
      %p131 = scmp.ne.s32.totalorder %s119, %s120
      %p132 = scmp.eq.s32.totalorder %s22, 3
      %p133 = por %p131, %p132
      %p135 = scmp.ne.s32.totalorder %s120, %s134
      %p136 = scmp.eq.s32.totalorder %s22, 0
      %p137 = por %p135, %p136
      %s139 = sadd.s32 %s138, 1
      %p142 = scmp.eq.s32.totalorder %s16, 3
      %p143 = scmp.ne.s32.totalorder %s138, %s140
      %p144 = scmp.eq.s32.totalorder %s16, 0
      %p145 = por %p143, %p144
      %p146 = scmp.ne.s32.totalorder %s138, %s140
      %p147 = scmp.eq.s32.totalorder %s21, 3
      %p148 = por %p146, %p147
      %p149 = scmp.ne.s32.totalorder %s140, %s141
      %p150 = scmp.eq.s32.totalorder %s21, 0
      %p151 = por %p149, %p150
      %p152 = scmp.ne.s32.totalorder %s140, %s141
      %p153 = scmp.eq.s32.totalorder %s22, 3
      %p154 = por %p152, %p153
      %p156 = scmp.ne.s32.totalorder %s141, %s155
      %p157 = scmp.eq.s32.totalorder %s22, 0
      %p158 = por %p156, %p157
      %s160 = sadd.s32 %s159, 1
      %p163 = scmp.eq.s32.totalorder %s16, 3
      %p164 = scmp.ne.s32.totalorder %s159, %s161
      %p165 = scmp.eq.s32.totalorder %s16, 0
      %p166 = por %p164, %p165
      %p167 = scmp.ne.s32.totalorder %s159, %s161
      %p168 = scmp.eq.s32.totalorder %s21, 3
      %p169 = por %p167, %p168
      %p170 = scmp.ne.s32.totalorder %s161, %s162
      %p171 = scmp.eq.s32.totalorder %s21, 0
      %p172 = por %p170, %p171
      %p173 = scmp.ne.s32.totalorder %s161, %s162
      %p174 = scmp.eq.s32.totalorder %s22, 3
      %p175 = por %p173, %p174
      %p177 = scmp.ne.s32.totalorder %s162, %s176
      %p178 = scmp.eq.s32.totalorder %s22, 0
      %p179 = por %p177, %p178
      %s181 = sadd.s32 %s180, 1
      %p184 = scmp.eq.s32.totalorder %s16, 3
      %p185 = scmp.ne.s32.totalorder %s180, %s182
      %p186 = scmp.eq.s32.totalorder %s16, 0
      %p187 = por %p185, %p186
      %p188 = scmp.ne.s32.totalorder %s180, %s182
      %p189 = scmp.eq.s32.totalorder %s21, 3
      %p190 = por %p188, %p189
      %p191 = scmp.ne.s32.totalorder %s182, %s183
      %p192 = scmp.eq.s32.totalorder %s21, 0
      %p193 = por %p191, %p192
      %p194 = scmp.ne.s32.totalorder %s182, %s183
      %p195 = scmp.eq.s32.totalorder %s22, 3
      %p196 = por %p194, %p195
      %p198 = scmp.ne.s32.totalorder %s183, %s197
      %p199 = scmp.eq.s32.totalorder %s22, 0
      %p200 = por %p198, %p199
      %s201 = ssub.s32 %s23, %s35
      %p202 = scmp.eq.s32.totalorder %s201, 0
      %s204 = sadd.s32 %s203, 1
      %s205 = scalar_select %p202, %s203, %s204
      %p208 = pneg %p202
      %p209 = scmp.eq.s32.totalorder %s16, 3
      %p210 = por %p208, %p209
      %p211 = scmp.ne.s32.totalorder %s203, %s206
      %p212 = scmp.eq.s32.totalorder %s16, 0
      %p213 = por %p211, %p212
      %p214 = scmp.ne.s32.totalorder %s203, %s206
      %p215 = scmp.eq.s32.totalorder %s21, 3
      %p216 = por %p214, %p215
      %p217 = scmp.ne.s32.totalorder %s206, %s207
      %p218 = scmp.eq.s32.totalorder %s21, 0
      %p219 = por %p217, %p218
      %p220 = scmp.ne.s32.totalorder %s206, %s207
      %p221 = scmp.eq.s32.totalorder %s22, 3
      %p222 = por %p220, %p221
      %p224 = scmp.ne.s32.totalorder %s207, %s223
      %p225 = scmp.eq.s32.totalorder %s22, 0
      %p226 = por %p224, %p225
      %p227 = scmp.le.s32.totalorder 1, %s16
      %p228 = scmp.lt.s32.totalorder %s16, 5
      %p229 = pnand %p227, %p228
      %p230 = pneg %p229
      // Predicated region
      $region9: #{tpu_custom_call.1} parent=5 // pred_check
        _
      $region10: #{tpu_custom_call.1} parent=5 // pred_check_branch
        %232 = sbr.rel (%p229) target = $region12
      $region11: #{tpu_custom_call.1} parent=5 // pred_region
        %s233 = ssub.s32 %s16, 1
        // Predicated region
        $region13: #{tpu_custom_call.1} parent=11 // pred_check
          %p234 = pneg %p109
        $region14: #{tpu_custom_call.1} parent=11 // pred_check_branch
          %236 = sbr.rel (%p234) target = $region16
        $region15: #{tpu_custom_call.1} parent=11 // pred_region
          _
        $region16: #{tpu_custom_call.1} parent=11 // pred_fallthru
          _
        // Predicated region
        $region17: #{tpu_custom_call.1} parent=11 // pred_check
          %p237 = pneg %p130
        $region18: #{tpu_custom_call.1} parent=11 // pred_check_branch
          %239 = sbr.rel (%p237) target = $region20
        $region19: #{tpu_custom_call.1} parent=11 // pred_region
          _
        $region20: #{tpu_custom_call.1} parent=11 // pred_fallthru
          _
        // Predicated region
        $region21: #{tpu_custom_call.1} parent=11 // pred_check
          %p240 = pneg %p151
        $region22: #{tpu_custom_call.1} parent=11 // pred_check_branch
          %242 = sbr.rel (%p240) target = $region24
        $region23: #{tpu_custom_call.1} parent=11 // pred_region
          _
        $region24: #{tpu_custom_call.1} parent=11 // pred_fallthru
          _
        // Predicated region
        $region25: #{tpu_custom_call.1} parent=11 // pred_check
          %p243 = pneg %p172
        $region26: #{tpu_custom_call.1} parent=11 // pred_check_branch
          %245 = sbr.rel (%p243) target = $region28
        $region27: #{tpu_custom_call.1} parent=11 // pred_region
          _
        $region28: #{tpu_custom_call.1} parent=11 // pred_fallthru
          _
        // Predicated region
        $region29: #{tpu_custom_call.1} parent=11 // pred_check
          %p246 = pneg %p193
        $region30: #{tpu_custom_call.1} parent=11 // pred_check_branch
          %248 = sbr.rel (%p246) target = $region32
        $region31: #{tpu_custom_call.1} parent=11 // pred_region
          _
        $region32: #{tpu_custom_call.1} parent=11 // pred_fallthru
          _
      $region12: #{tpu_custom_call.1} parent=5 // pred_fallthru
        _
      %p249 = scmp.lt.s32.totalorder %s16, 4
      // Predicated region
      $region33: #{tpu_custom_call.1} parent=5 // pred_check
        %p250 = pneg %p249
      $region34: #{tpu_custom_call.1} parent=5 // pred_check_branch
        %252 = sbr.rel (%p250) target = $region36
      $region35: #{tpu_custom_call.1} parent=5 // pred_region
        // Predicated region
        $region37: #{tpu_custom_call.1} parent=35 // pred_check
          %p253 = pneg %p52
        $region38: #{tpu_custom_call.1} parent=35 // pred_check_branch
          %255 = sbr.rel (%p253) target = $region40
        $region39: #{tpu_custom_call.1} parent=35 // pred_region
          %s256 = smul.u32 %s23, 2
          %s257 = sadd.s32 %s256, %s24
          %s258 = smul.u32 8, %s257
          %p259 = scmp.lt.s32.totalorder %s258, 31
          %s260 = scalar_select %p259, %s258, 31
          %s261 = smul.addr %s260, 8
          %s262 = scalar_lea.vmem %s0, %s261
          %s263 = smul.u32 %s23, 2
          %s264 = sadd.s32 %s263, %s24
          %s265 = smul.u32 8, %s264
        $region40: #{tpu_custom_call.1} parent=35 // pred_fallthru
          _
        // Predicated region
        $region41: #{tpu_custom_call.1} parent=35 // pred_check
          %p266 = pneg %p82
        $region42: #{tpu_custom_call.1} parent=35 // pred_check_branch
          %268 = sbr.rel (%p266) target = $region44
        $region43: #{tpu_custom_call.1} parent=35 // pred_region
          %s269 = smul.u32 %s23, 2
          %s270 = sadd.s32 %s269, %s24
          %s271 = smul.u32 8, %s270
          %p272 = scmp.lt.s32.totalorder %s271, 31
          %s273 = scalar_select %p272, %s271, 31
          %s274 = smul.addr %s273, 8
          %s275 = scalar_lea.vmem %s1, %s274
          %s276 = smul.u32 %s23, 2
          %s277 = sadd.s32 %s276, %s24
          %s278 = smul.u32 8, %s277
        $region44: #{tpu_custom_call.1} parent=35 // pred_fallthru
          _
      $region36: #{tpu_custom_call.1} parent=5 // pred_fallthru
        _
      %p279 = scmp.le.s32.totalorder 1, %s16
      %p280 = scmp.lt.s32.totalorder %s16, 5
      %p281 = pnand %p279, %p280
      %p282 = pneg %p281
      // Predicated region
      $region45: #{tpu_custom_call.1} parent=5 // pred_check
        _
      $region46: #{tpu_custom_call.1} parent=5 // pred_check_branch
        %284 = sbr.rel (%p281) target = $region48
      $region47: #{tpu_custom_call.1} parent=5 // pred_region
        %s285 = ssub.s32 %s16, 1
        %s286 = smul.u32 %s25, 2
        %s287 = sadd.s32 %s286, %s26
        %s288 = smul.u32 8, %s287
        %p289 = scmp.lt.s32.totalorder %s288, 31
        %s290 = scalar_select %p289, %s288, 31
        %s291 = smul.addr %s290, 8
        %s292 = scalar_lea.vmem %s0, %s291
        %p293 = pneg %p58
        %p294 = pneg %p55
        %s295 = smul.u32 %s25, 2
        %s296 = sadd.s32 %s295, %s26
        %s297 = smul.u32 8, %s296
        %p298 = scmp.lt.s32.totalorder %s297, 31
        %s299 = scalar_select %p298, %s297, 31
        %s300 = smul.addr %s299, 8
        %s301 = scalar_lea.vmem %s1, %s300
        %p302 = pneg %p88
        %p303 = pneg %p85
        %p304 = pneg %p109
        %p305 = pneg %p106
        %p306 = pneg %p130
        %p307 = pneg %p127
        %p308 = pneg %p151
        %p309 = pneg %p148
        %p310 = pneg %p172
        %p311 = pneg %p169
        %p312 = pneg %p193
        %p313 = pneg %p190
        %p314 = pneg %p219
        %p315 = pneg %p216
        %s316 = sand.u32 %s206, 1
        %s317 = scalar_lea.sflag [#allocation5], %s316
        %s318 = sand.u32 %s206, 1
        %s319 = smul.addr %s318, 8
        %s320 = scalar_lea.vmem [#allocation4], %s319
        %s321 = smul.u32 %s25, 2
        %s322 = sadd.s32 %s321, %s26
        %s323 = smul.u32 8, %s322
        %p324 = scmp.lt.s32.totalorder %s323, 31
        %s325 = scalar_select %p324, %s323, 31
        %s326 = smul.addr %s325, 8
        %s327 = scalar_lea.vmem %s0, %s326
        %s328 = smul.u32 %s25, 2
        %s329 = sadd.s32 %s328, %s26
        %s330 = smul.u32 8, %s329
        %s331 = smul.u32 %s25, 2
        %s332 = sadd.s32 %s331, %s26
        %s333 = smul.u32 8, %s332
        %p334 = scmp.lt.s32.totalorder %s333, 31
        %s335 = scalar_select %p334, %s333, 31
        %s336 = smul.addr %s335, 8
        %s337 = scalar_lea.vmem %s1, %s336
        %s338 = smul.u32 %s25, 2
        %s339 = sadd.s32 %s338, %s26
        %s340 = smul.u32 8, %s339
        %p341 = scmp.eq.s32.totalorder %s26, 0
        // Predicated region
        $region49: #{tpu_custom_call.1} parent=47 // pred_check
          %p342 = pneg %p341
        $region50: #{tpu_custom_call.1} parent=47 // pred_check_branch
          %344 = sbr.rel (%p342) target = $region52
        $region51: #{tpu_custom_call.1} parent=47 // pred_region
          %vm345 = vcmask 0
          %346 = vst.msk [vmem:[#allocation2] sm:$0x1] %vm345, 0.0
          %347 = vst [vmem:[#allocation3] sm:$0x1] 0.0
        $region52: #{tpu_custom_call.1} parent=47 // pred_fallthru
          _
        %v348 = vld [vmem:[%s327] sm:$0xff]
        %v349 = vld [vmem:[%s327 + $0x8] sm:$0xff]
        %v350 = vld [vmem:[%s327 + $0x10] sm:$0xff]
        %v351 = vld [vmem:[%s327 + $0x18] sm:$0xff]
        %v352 = vld [vmem:[%s327 + $0x20] sm:$0xff]
        %v353 = vld [vmem:[%s327 + $0x28] sm:$0xff]
        %v354 = vld [vmem:[%s327 + $0x30] sm:$0xff]
        %v355 = vld [vmem:[%s327 + $0x38] sm:$0xff]
        %v356 = vld [vmem:[%s337] sm:$0xff]
        %v357 = vld [vmem:[%s337 + $0x8] sm:$0xff]
        %v358 = vld [vmem:[%s337 + $0x10] sm:$0xff]
        %v359 = vld [vmem:[%s337 + $0x18] sm:$0xff]
        %v360 = vld [vmem:[%s337 + $0x20] sm:$0xff]
        %v361 = vld [vmem:[%s337 + $0x28] sm:$0xff]
        %v362 = vld [vmem:[%s337 + $0x30] sm:$0xff]
        %v363 = vld [vmem:[%s337 + $0x38] sm:$0xff]
        %v364 = vld [vmem:[%s3] sm:$0xff]
        %v365 = vld [vmem:[%s3 + $0x8] sm:$0xff]
        %v366 = vld [vmem:[%s3 + $0x10] sm:$0xff]
        %v367 = vld [vmem:[%s3 + $0x18] sm:$0xff]
        %v368 = vld [vmem:[%s4] sm:$0x1]
        %v370 = vperm.slane %v368, 0
        %vm372 = vcmask 261120
        %v374 = vsel %vm372, %v348, 0
        %v377 = vsel %vm372, %v349, 0
        %v380 = vsel %vm372, %v350, 0
        %v383 = vsel %vm372, %v351, 0
        %v386 = vsel %vm372, %v352, 0
        %v389 = vsel %vm372, %v353, 0
        %v392 = vsel %vm372, %v354, 0
        %v395 = vsel %vm372, %v355, 0
        %397 = vmatpush.msra.mxu0 0.0
        %398 = vmatpush.msra.mxu0 0.0
        %399 = vmatpush.msra.mxu0 0.0
        %400 = vmatpush.msra.mxu0 0.0
        %401 = vmatpush.msra.mxu0 0.0
        %402 = vmatpush.msra.mxu0 0.0
        %403 = vmatpush.msra.mxu0 0.0
        %404 = vmatpush.msra.mxu0 0.0
        %405 = vmatpush.msra.mxu0 0.0
        %406 = vmatpush.msra.mxu0 0.0
        %407 = vmatpush.msra.mxu0 0.0
        %408 = vmatpush.msra.mxu0 0.0
        %409 = vmatpush.msra.mxu0 %v367
        %410 = vmatpush.msra.mxu0 %v366
        %411 = vmatpush.msra.mxu0 %v365
        %412 = vmatpush.msra.mxu0 %v364
        %413 = vmatmul.f32.gmra.mxu0 %v374
        %v414 = vpop.f32.mrf.mxu0
        %v415 = vadd.f32 %v370, %v414
        %416 = vmatmul.f32.gmra.mxu0 %v377
        %v417 = vpop.f32.mrf.mxu0
        %v418 = vadd.f32 %v370, %v417
        %419 = vmatmul.f32.gmra.mxu0 %v380
        %v420 = vpop.f32.mrf.mxu0
        %v421 = vadd.f32 %v370, %v420
        %422 = vmatmul.f32.gmra.mxu0 %v383
        %v423 = vpop.f32.mrf.mxu0
        %v424 = vadd.f32 %v370, %v423
        %425 = vmatmul.f32.gmra.mxu0 %v386
        %v426 = vpop.f32.mrf.mxu0
        %v427 = vadd.f32 %v370, %v426
        %428 = vmatmul.f32.gmra.mxu0 %v389
        %v429 = vpop.f32.mrf.mxu0
        %v430 = vadd.f32 %v370, %v429
        %431 = vmatmul.f32.gmra.mxu0 %v392
        %v432 = vpop.f32.mrf.mxu0
        %v433 = vadd.f32 %v370, %v432
        %434 = vmatmul.f32.gmra.mxu0 %v395
        %v435 = vpop.f32.mrf.mxu0
        %v436 = vadd.f32 %v370, %v435
        %437 = vdwg.mxu0
        %v438 = vmax.f32 %v415, 0.0
        %v439 = vmax.f32 %v418, 0.0
        %v440 = vmax.f32 %v421, 0.0
        %v441 = vmax.f32 %v424, 0.0
        %v442 = vmax.f32 %v427, 0.0
        %v443 = vmax.f32 %v430, 0.0
        %v444 = vmax.f32 %v433, 0.0
        %v445 = vmax.f32 %v436, 0.0
        %v446 = vld [vmem:[%s5] sm:$0xff]
        %v447 = vld [vmem:[%s5 + $0x8] sm:$0xff]
        %v448 = vld [vmem:[%s5 + $0x10] sm:$0xff]
        %v449 = vld [vmem:[%s5 + $0x18] sm:$0xff]
        %v450 = vld [vmem:[%s5 + $0x20] sm:$0xff]
        %v451 = vld [vmem:[%s5 + $0x28] sm:$0xff]
        %v452 = vld [vmem:[%s5 + $0x30] sm:$0xff]
        %v453 = vld [vmem:[%s5 + $0x38] sm:$0xff]
        %v454 = vld [vmem:[%s5 + $0x40] sm:$0xff]
        %v455 = vld [vmem:[%s5 + $0x48] sm:$0xff]
        %v456 = vld [vmem:[%s5 + $0x50] sm:$0xff]
        %v457 = vld [vmem:[%s5 + $0x58] sm:$0xff]
        %v458 = vld [vmem:[%s5 + $0x60] sm:$0xff]
        %v459 = vld [vmem:[%s5 + $0x68] sm:$0xff]
        %v460 = vld [vmem:[%s5 + $0x70] sm:$0xff]
        %v461 = vld [vmem:[%s5 + $0x78] sm:$0xff]
        %v462 = vld [vmem:[%s6] sm:$0x1]
        %v464 = vperm.slane %v462, 0
        %466 = vmatpush.msra.mxu0 %v461
        %467 = vmatpush.msra.mxu0 %v460
        %468 = vmatpush.msra.mxu0 %v459
        %469 = vmatpush.msra.mxu0 %v458
        %470 = vmatpush.msra.mxu0 %v457
        %471 = vmatpush.msra.mxu0 %v456
        %472 = vmatpush.msra.mxu0 %v455
        %473 = vmatpush.msra.mxu0 %v454
        %474 = vmatpush.msra.mxu0 %v453
        %475 = vmatpush.msra.mxu0 %v452
        %476 = vmatpush.msra.mxu0 %v451
        %477 = vmatpush.msra.mxu0 %v450
        %478 = vmatpush.msra.mxu0 %v449
        %479 = vmatpush.msra.mxu0 %v448
        %480 = vmatpush.msra.mxu0 %v447
        %481 = vmatpush.msra.mxu0 %v446
        %482 = vmatmul.f32.gmra.mxu0 %v438
        %v483 = vpop.f32.mrf.mxu0
        %v484 = vadd.f32 %v464, %v483
        %485 = vmatmul.f32.gmra.mxu0 %v439
        %v486 = vpop.f32.mrf.mxu0
        %v487 = vadd.f32 %v464, %v486
        %488 = vmatmul.f32.gmra.mxu0 %v440
        %v489 = vpop.f32.mrf.mxu0
        %v490 = vadd.f32 %v464, %v489
        %491 = vmatmul.f32.gmra.mxu0 %v441
        %v492 = vpop.f32.mrf.mxu0
        %v493 = vadd.f32 %v464, %v492
        %494 = vmatmul.f32.gmra.mxu0 %v442
        %v495 = vpop.f32.mrf.mxu0
        %v496 = vadd.f32 %v464, %v495
        %497 = vmatmul.f32.gmra.mxu0 %v443
        %v498 = vpop.f32.mrf.mxu0
        %v499 = vadd.f32 %v464, %v498
        %500 = vmatmul.f32.gmra.mxu0 %v444
        %v501 = vpop.f32.mrf.mxu0
        %v502 = vadd.f32 %v464, %v501
        %503 = vmatmul.f32.gmra.mxu0 %v445
        %v504 = vpop.f32.mrf.mxu0
        %v505 = vadd.f32 %v464, %v504
        %506 = vdwg.mxu0
        %507 = vmax.xlane.f32.xlu0 %v484
        %v508 = vpop.xlane.xlu0 %507
        %509 = vmax.xlane.f32.xlu0 %v487
        %v510 = vpop.xlane.xlu0 %509
        %511 = vmax.xlane.f32.xlu0 %v490
        %v512 = vpop.xlane.xlu0 %511
        %513 = vmax.xlane.f32.xlu0 %v493
        %v514 = vpop.xlane.xlu0 %513
        %515 = vmax.xlane.f32.xlu0 %v496
        %v516 = vpop.xlane.xlu0 %515
        %517 = vmax.xlane.f32.xlu0 %v499
        %v518 = vpop.xlane.xlu0 %517
        %519 = vmax.xlane.f32.xlu0 %v502
        %v520 = vpop.xlane.xlu0 %519
        %521 = vmax.xlane.f32.xlu0 %v505
        %v522 = vpop.xlane.xlu0 %521
        %v523 = vsub.f32 %v484, %v508
        %v524 = vsub.f32 %v487, %v510
        %v525 = vsub.f32 %v490, %v512
        %v526 = vsub.f32 %v493, %v514
        %v527 = vsub.f32 %v496, %v516
        %v528 = vsub.f32 %v499, %v518
        %v529 = vsub.f32 %v502, %v520
        %v530 = vsub.f32 %v505, %v522
        %v531 = vmul.f32 %v523, 1.442695
        %v532 = vpow.pop %v531
        %v533 = vmul.f32 %v524, 1.442695
        %v534 = vpow.pop %v533
        %v535 = vmul.f32 %v525, 1.442695
        %v536 = vpow.pop %v535
        %v537 = vmul.f32 %v526, 1.442695
        %v538 = vpow.pop %v537
        %v539 = vmul.f32 %v527, 1.442695
        %v540 = vpow.pop %v539
        %v541 = vmul.f32 %v528, 1.442695
        %v542 = vpow.pop %v541
        %v543 = vmul.f32 %v529, 1.442695
        %v544 = vpow.pop %v543
        %v545 = vmul.f32 %v530, 1.442695
        %v546 = vpow.pop %v545
        %547 = vadd.xlane.f32.xlu0 %v532
        %v548 = vpop.xlane.xlu0 %547
        %549 = vadd.xlane.f32.xlu0 %v534
        %v550 = vpop.xlane.xlu0 %549
        %551 = vadd.xlane.f32.xlu0 %v536
        %v552 = vpop.xlane.xlu0 %551
        %553 = vadd.xlane.f32.xlu0 %v538
        %v554 = vpop.xlane.xlu0 %553
        %555 = vadd.xlane.f32.xlu0 %v540
        %v556 = vpop.xlane.xlu0 %555
        %557 = vadd.xlane.f32.xlu0 %v542
        %v558 = vpop.xlane.xlu0 %557
        %559 = vadd.xlane.f32.xlu0 %v544
        %v560 = vpop.xlane.xlu0 %559
        %561 = vadd.xlane.f32.xlu0 %v546
        %v562 = vpop.xlane.xlu0 %561
        %v563 = vlog2.pop %v548
        %v564 = vmul.f32 %v563, 0.6931472
        %v565 = vlog2.pop %v550
        %v566 = vmul.f32 %v565, 0.6931472
        %v567 = vlog2.pop %v552
        %v568 = vmul.f32 %v567, 0.6931472
        %v569 = vlog2.pop %v554
        %v570 = vmul.f32 %v569, 0.6931472
        %v571 = vlog2.pop %v556
        %v572 = vmul.f32 %v571, 0.6931472
        %v573 = vlog2.pop %v558
        %v574 = vmul.f32 %v573, 0.6931472
        %v575 = vlog2.pop %v560
        %v576 = vmul.f32 %v575, 0.6931472
        %v577 = vlog2.pop %v562
        %v578 = vmul.f32 %v577, 0.6931472
        %v579 = vsub.f32 %v523, %v564
        %v580 = vsub.f32 %v524, %v566
        %v581 = vsub.f32 %v525, %v568
        %v582 = vsub.f32 %v526, %v570
        %v583 = vsub.f32 %v527, %v572
        %v584 = vsub.f32 %v528, %v574
        %v585 = vsub.f32 %v529, %v576
        %v586 = vsub.f32 %v530, %v578
        %v587 = vlaneseq
        %v588 = vand.u32 %v587, 127
        %589 = vset.pattern.permute.xlu0 0
        %590 = vperm.xlu0 %589, %v356
        %v591 = vpop.permute.xlu0 %590
        %592 = vset.pattern.permute.xlu0 0
        %593 = vperm.xlu0 %592, %v357
        %v594 = vpop.permute.xlu0 %593
        %595 = vset.pattern.permute.xlu0 0
        %596 = vperm.xlu0 %595, %v358
        %v597 = vpop.permute.xlu0 %596
        %598 = vset.pattern.permute.xlu0 0
        %599 = vperm.xlu0 %598, %v359
        %v600 = vpop.permute.xlu0 %599
        %601 = vset.pattern.permute.xlu0 0
        %602 = vperm.xlu0 %601, %v360
        %v603 = vpop.permute.xlu0 %602
        %604 = vset.pattern.permute.xlu0 0
        %605 = vperm.xlu0 %604, %v361
        %v606 = vpop.permute.xlu0 %605
        %607 = vset.pattern.permute.xlu0 0
        %608 = vperm.xlu0 %607, %v362
        %v609 = vpop.permute.xlu0 %608
        %610 = vset.pattern.permute.xlu0 0
        %611 = vperm.xlu0 %610, %v363
        %v612 = vpop.permute.xlu0 %611
        %vm613 = vcmp.eq.s32.totalorder %v588, %v591
        %vm614 = vcmp.eq.s32.totalorder %v588, %v594
        %vm615 = vcmp.eq.s32.totalorder %v588, %v597
        %vm616 = vcmp.eq.s32.totalorder %v588, %v600
        %vm617 = vcmp.eq.s32.totalorder %v588, %v603
        %vm618 = vcmp.eq.s32.totalorder %v588, %v606
        %vm619 = vcmp.eq.s32.totalorder %v588, %v609
        %vm620 = vcmp.eq.s32.totalorder %v588, %v612
        %v621 = vsel %vm613, %v579, 0.0
        %v622 = vsel %vm614, %v580, 0.0
        %v623 = vsel %vm615, %v581, 0.0
        %v624 = vsel %vm616, %v582, 0.0
        %v625 = vsel %vm617, %v583, 0.0
        %v626 = vsel %vm618, %v584, 0.0
        %v627 = vsel %vm619, %v585, 0.0
        %v628 = vsel %vm620, %v586, 0.0
        %629 = vadd.xlane.f32.xlu0 %v621
        %v630 = vpop.xlane.xlu0 %629
        %631 = vadd.xlane.f32.xlu0 %v622
        %v632 = vpop.xlane.xlu0 %631
        %633 = vadd.xlane.f32.xlu0 %v623
        %v634 = vpop.xlane.xlu0 %633
        %635 = vadd.xlane.f32.xlu0 %v624
        %v636 = vpop.xlane.xlu0 %635
        %637 = vadd.xlane.f32.xlu0 %v625
        %v638 = vpop.xlane.xlu0 %637
        %639 = vadd.xlane.f32.xlu0 %v626
        %v640 = vpop.xlane.xlu0 %639
        %641 = vadd.xlane.f32.xlu0 %v627
        %v642 = vpop.xlane.xlu0 %641
        %643 = vadd.xlane.f32.xlu0 %v628
        %v644 = vpop.xlane.xlu0 %643
        %v645 = vld [vmem:[#allocation2] sm:$0x1]
        %vm646 = vcmask 7168
        %v647 = vsel %vm646, %v630, 0.0
        %v648 = vsel %vm646, %v632, 0.0
        %v649 = vadd.f32 %v647, %v648
        %v650 = vsel %vm646, %v634, 0.0
        %v651 = vadd.f32 %v649, %v650
        %v652 = vsel %vm646, %v636, 0.0
        %v653 = vadd.f32 %v651, %v652
        %v654 = vsel %vm646, %v638, 0.0
        %v655 = vadd.f32 %v653, %v654
        %v656 = vsel %vm646, %v640, 0.0
        %v657 = vadd.f32 %v655, %v656
        %v658 = vsel %vm646, %v642, 0.0
        %v659 = vadd.f32 %v657, %v658
        %v660 = vsel %vm646, %v644, 0.0
        %v661 = vadd.f32 %v659, %v660
        %662 = vadd.xlane.f32.xlu0 %v661
        %v663 = vpop.xlane.xlu0 %662
        %v664 = vrot.slane %v663, 4
        %v665 = vadd.f32 %v663, %v664
        %v666 = vrot.slane %v665, 2
        %v667 = vadd.f32 %v665, %v666
        %v668 = vrot.slane %v667, 1
        %v669 = vadd.f32 %v667, %v668
        %s670 = vtos %v669
        %v671 = vstv %s670
        %v672 = vadd.f32 %v645, %v671
        %vm673 = vcmask 0
        %674 = vst.msk [vmem:[#allocation2] sm:$0x1] %vm673, %v672
        %s675 = smul.u32 %s25, 2
        %s676 = sadd.s32 %s675, %s26
        %s677 = sadd.s32 %s676, 1
        %s678 = smul.u32 %s677, 64
        %p679 = scmp.gt.s32.totalorder %s678, 200
        %p680 = scmp.le.s32.totalorder %s678, 200
        // Predicated region
        $region53: #{tpu_custom_call.1} parent=47 // pred_check
          %p681 = pneg %p680
        $region54: #{tpu_custom_call.1} parent=47 // pred_check_branch
          %683 = sbr.rel (%p681) target = $region56
        $region55: #{tpu_custom_call.1} parent=47 // pred_region
          %v684 = vld [vmem:[#allocation3] sm:$0x1]
          %v685 = vadd.f32 %v579, %v580
          %v686 = vadd.f32 %v685, %v581
          %v687 = vadd.f32 %v686, %v582
          %v688 = vadd.f32 %v687, %v583
          %v689 = vadd.f32 %v688, %v584
          %v690 = vadd.f32 %v689, %v585
          %v691 = vadd.f32 %v690, %v586
          %v692 = vrot.slane %v691, 4
          %v693 = vadd.f32 %v691, %v692
          %v694 = vrot.slane %v693, 2
          %v695 = vadd.f32 %v693, %v694
          %v696 = vrot.slane %v695, 1
          %v697 = vadd.f32 %v695, %v696
          %v698 = vadd.f32 %v684, %v697
          %699 = vst [vmem:[#allocation3] sm:$0x1] %v698
        $region56: #{tpu_custom_call.1} parent=47 // pred_fallthru
          _
        // Predicated region
        $region57: #{tpu_custom_call.1} parent=47 // pred_check
          %p700 = pneg %p679
        $region58: #{tpu_custom_call.1} parent=47 // pred_check_branch
          %702 = sbr.rel (%p700) target = $region60
        $region59: #{tpu_custom_call.1} parent=47 // pred_region
          %v703 = vlaneseq
          %v704 = vshrl.u32 %v703, 7
          %v705 = vadd.s32 %v704, 8
          %v706 = vadd.s32 %v704, 16
          %v707 = vadd.s32 %v704, 24
          %v708 = vadd.s32 %v704, 32
          %v709 = vadd.s32 %v704, 40
          %v710 = vadd.s32 %v704, 48
          %v711 = vadd.s32 %v704, 56
          %s712 = smul.u32 %s676, 64
          %v713 = vstv %s712
          %v714 = vadd.s32 %v704, %v713
          %v715 = vadd.s32 %v705, %v713
          %v716 = vadd.s32 %v706, %v713
          %v717 = vadd.s32 %v707, %v713
          %v718 = vadd.s32 %v708, %v713
          %v719 = vadd.s32 %v709, %v713
          %v720 = vadd.s32 %v710, %v713
          %v721 = vadd.s32 %v711, %v713
          %vm722 = vcmp.lt.s32.totalorder %v714, 200
          %vm723 = vcmp.lt.s32.totalorder %v715, 200
          %vm724 = vcmp.lt.s32.totalorder %v716, 200
          %vm725 = vcmp.lt.s32.totalorder %v717, 200
          %vm726 = vcmp.lt.s32.totalorder %v718, 200
          %vm727 = vcmp.lt.s32.totalorder %v719, 200
          %vm728 = vcmp.lt.s32.totalorder %v720, 200
          %vm729 = vcmp.lt.s32.totalorder %v721, 200
          %v730 = vsel %vm722, 1, 0
          %v731 = vsel %vm723, 1, 0
          %v732 = vsel %vm724, 1, 0
          %v733 = vsel %vm725, 1, 0
          %v734 = vsel %vm726, 1, 0
          %v735 = vsel %vm727, 1, 0
          %v736 = vsel %vm728, 1, 0
          %v737 = vsel %vm729, 1, 0
          %v738 = vcvt.s32.f32 %v730
          %v739 = vcvt.s32.f32 %v731
          %v740 = vcvt.s32.f32 %v732
          %v741 = vcvt.s32.f32 %v733
          %v742 = vcvt.s32.f32 %v734
          %v743 = vcvt.s32.f32 %v735
          %v744 = vcvt.s32.f32 %v736
          %v745 = vcvt.s32.f32 %v737
          %v746 = vld [vmem:[#allocation3] sm:$0x1]
          %v747 = vmul.f32 %v579, %v738
          %v748 = vmul.f32 %v580, %v739
          %v749 = vmul.f32 %v581, %v740
          %v750 = vmul.f32 %v582, %v741
          %v751 = vmul.f32 %v583, %v742
          %v752 = vmul.f32 %v584, %v743
          %v753 = vmul.f32 %v585, %v744
          %v754 = vmul.f32 %v586, %v745
          %v755 = vadd.f32 %v747, %v748
          %v756 = vadd.f32 %v755, %v749
          %v757 = vadd.f32 %v756, %v750
          %v758 = vadd.f32 %v757, %v751
          %v759 = vadd.f32 %v758, %v752
          %v760 = vadd.f32 %v759, %v753
          %v761 = vadd.f32 %v760, %v754
          %v762 = vrot.slane %v761, 4
          %v763 = vadd.f32 %v761, %v762
          %v764 = vrot.slane %v763, 2
          %v765 = vadd.f32 %v763, %v764
          %v766 = vrot.slane %v765, 1
          %v767 = vadd.f32 %v765, %v766
          %v768 = vadd.f32 %v746, %v767
          %769 = vst [vmem:[#allocation3] sm:$0x1] %v768
        $region60: #{tpu_custom_call.1} parent=47 // pred_fallthru
          _
        %p770 = scmp.eq.s32.totalorder %s26, 1
        // Predicated region
        $region61: #{tpu_custom_call.1} parent=47 // pred_check
          %p771 = pneg %p770
        $region62: #{tpu_custom_call.1} parent=47 // pred_check_branch
          %773 = sbr.rel (%p771) target = $region64
        $region63: #{tpu_custom_call.1} parent=47 // pred_region
          %v774 = vld [vmem:[#allocation3] sm:$0x1]
          %v775 = vld [vmem:[%s2] sm:$0x1]
          %v776 = vmul.f32 %v774, %v775
          %vm777 = vcmask 1040384
          %v778 = vsel %vm777, %v776, 0.0
          %779 = vadd.xlane.f32.xlu0 %v778
          %v780 = vpop.xlane.xlu0 %779
          %v781 = vrot.slane %v780, 4
          %v782 = vadd.f32 %v780, %v781
          %v783 = vrot.slane %v782, 2
          %v784 = vadd.f32 %v782, %v783
          %v785 = vrot.slane %v784, 1
          %v786 = vadd.f32 %v784, %v785
          %s787 = vtos %v786
          %s788 = smul.f32 %s787, 0.005
          %v789 = vld [vmem:[#allocation2] sm:$0x1]
          %v790 = vstv %s788
          %v791 = vsub.f32 %v789, %v790
          %v792 = vmul.f32 %v791, 0.005
          %v794 = vperm.slane %v792, 0
          %795 = vset.pattern.permute.xlu0 0
          %796 = vperm.xlu0 %795, %v794
          %v797 = vpop.permute.xlu0 %796
          %799 = vst [vmem:[%s320] sm:$0xff] %v797
        $region64: #{tpu_custom_call.1} parent=47 // pred_fallthru
          _
        %s800 = sand.u32 %s206, 1
        %s801 = scalar_lea.sflag [#allocation5], %s800
        %s802 = sand.u32 %s206, 1
        %s803 = smul.addr %s802, 8
        %s804 = scalar_lea.vmem [#allocation4], %s803
        // Predicated region
        $region65: #{tpu_custom_call.1} parent=47 // pred_check
          %p805 = pneg %p216
        $region66: #{tpu_custom_call.1} parent=47 // pred_check_branch
          %807 = sbr.rel (%p805) target = $region68
        $region67: #{tpu_custom_call.1} parent=47 // pred_region
          %809 = vsyncadd %s801, 0
          %s810 = smul.addr %s25, 8
          %s811 = scalar_lea.hbm %s7, %s810
          %s813 = sshll.u32 %s804, 4
          %s814 = int_to_ptr.vmem [resolvable:$true] %s813
          %s815 = sshll.u32 %s811, 4
          %s816 = int_to_ptr.hbm [resolvable:$true] %s815
          %818 = dma.vmem_to_hbm [thread:$0]  %s814, 128, %s816, %s801
        $region68: #{tpu_custom_call.1} parent=47 // pred_fallthru
          _
      $region48: #{tpu_custom_call.1} parent=5 // pred_fallthru
        _
      %p819 = scmp.le.s32.totalorder 2, %s16
      // Predicated region
      $region69: #{tpu_custom_call.1} parent=5 // pred_check
        %p820 = pneg %p819
      $region70: #{tpu_custom_call.1} parent=5 // pred_check_branch
        %822 = sbr.rel (%p820) target = $region72
      $region71: #{tpu_custom_call.1} parent=5 // pred_region
        %s823 = ssub.s32 %s16, 2
        // Predicated region
        $region73: #{tpu_custom_call.1} parent=71 // pred_check
          %p824 = pneg %p222
        $region74: #{tpu_custom_call.1} parent=71 // pred_check_branch
          %826 = sbr.rel (%p824) target = $region76
        $region75: #{tpu_custom_call.1} parent=71 // pred_region
          %s827 = sand.u32 %s207, 1
          %s828 = scalar_lea.sflag [#allocation5], %s827
          %s829 = sand.u32 %s207, 1
          %s830 = smul.addr %s829, 8
          %s831 = scalar_lea.vmem [#allocation4], %s830
          %833 = dma.done %s828, 128
        $region76: #{tpu_custom_call.1} parent=71 // pred_fallthru
          _
      $region72: #{tpu_custom_call.1} parent=5 // pred_fallthru
        _
    $region6: #{tpu_custom_call.1} parent=1 // loop_footer
      %s20 = sadd.s32 1, %s16
    $region7: #{tpu_custom_call.1} parent=1 // loop_footer_branch
      %15 = sbr.rel target = $region3
    $region8: #{tpu_custom_call.1} parent=1 // loop_exit
      _
    %834 = vsyncpa [#allocation5], 1
    %s835 = scalar_lea.sflag [#allocation5], 1
    %836 = vsyncpa %s835, 1

</llo_original>
